<compile_context>
chip_gen: v7x
topology: tpu7x:2x2x1
jax: 0.10.0
libtpu: 0.0.40
codegen_flags: <defaults>
</compile_context>

<pallas_src>
import functools

import jax
import jax.numpy as jnp
from jax.experimental import pallas as pl
from jax.experimental.pallas import tpu as pltpu


def _round_up(n, m):
    return -(-n // m) * m


def _vmem_capacity_bytes():
    """Per-core VMEM capacity; conservative fallback (v7x per-TC) if unavailable."""
    try:
        return int(pltpu.get_tpu_info().vmem_capacity_bytes)
    except Exception:
        return 64 * 1024 * 1024


def _pick_block_b(B, D, H, vmem_capacity):
    """Lane-aligned (multiple of 128) batch tile, capped so the per-step
    activations fit in roughly half of VMEM, with >= 2 grid steps when B > 128."""
    # Bytes per batch column that scale with block_b:
    #   x tile (D rows f32, double-buffered) + h1/h2 intermediates (2*H rows f32)
    #   + output slab (padded to 8 sublanes, double-buffered).
    per_col = 4 * (2 * D + 2 * H + 2 * 8)
    cap = (vmem_capacity // 2) // per_col
    cap = max(128, (cap // 128) * 128)
    cap = min(cap, 2048)                       # v5e-friendly upper bound
    if B <= 256:
        blk = 128                              # lane-dense; 2 steps once B > 128
    else:
        blk = max(128, ((B // 2) // 128) * 128)  # >= 2 grid steps
    return min(blk, cap)


def _mlp_kernel(x_ref, w1_ref, b1_ref, w2_ref, b2_ref, w3_ref, b3_ref, o_ref):
    cdt = w1_ref.dtype                         # bf16 (fast MXU path) or f32
    # x_ref is already (D, block_b): batch on lanes, no in-kernel transpose.
    x_t = x_ref[...].astype(cdt)
    # Layer 1 (MXU): (H, D) @ (D, block_b) -> (H, block_b), f32 accumulation.
    h1 = jnp.dot(w1_ref[...], x_t, preferred_element_type=jnp.float32)
    h1 = jnp.maximum(h1 + b1_ref[...], 0.0)    # bias + ReLU stay f32 on the VPU
    # Layer 2 (MXU): (H, H) @ (H, block_b) -> (H, block_b).
    h2 = jnp.dot(w2_ref[...], h1.astype(cdt), preferred_element_type=jnp.float32)
    h2 = jnp.maximum(h2 + b2_ref[...], 0.0)
    # Layer 3: out_features == 1 -> VPU multiply + sublane reduce (MXU stays free).
    out = jnp.sum(h2 * w3_ref[...], axis=0, keepdims=True) + b3_ref[0]   # (1, block_b)
    o_ref[...] = out.astype(o_ref.dtype)


@functools.partial(jax.jit, static_argnames=("block_b", "use_bf16"))
def mlp_net(x, params, block_b=None, use_bf16=True):
    """Fused 3-layer MLP.  x: (B, data_dim) f32 -> (B, 1) f32.

    params use torch.nn.Linear layouts:
      (W1 (H,D), b1 (H,), W2 (H,H), b2 (H,), W3 (1,H), b3 (1,))
    """
    w1, b1, w2, b2, w3, b3 = params
    B, D = x.shape
    H = w1.shape[0]

    vmem_capacity = _vmem_capacity_bytes()
    if block_b is None:
        block_b = _pick_block_b(B, D, H, vmem_capacity)
    block_b = _round_up(block_b, 128)          # lane-dense output slab, full vregs
    Bp = _round_up(B, block_b)

    # Pre-transpose once in the wrapper: (Bp, D) -> (D, Bp).  Every kernel-side
    # tensor is then batch-on-lanes with zero in-kernel relayout.
    if Bp != B:
        x = jnp.pad(x, ((0, Bp - B), (0, 0)))
    x_t = x.T                                   # (D, Bp)

    cdt = jnp.bfloat16 if use_bf16 else jnp.float32
    cdt_bytes = 2 if use_bf16 else 4
    w1k = w1.astype(cdt)                          # (H, D)
    w2k = w2.astype(cdt)                          # (H, H)
    b1k = b1.reshape(H, 1).astype(jnp.float32)    # column bias (broadcast over lanes)
    b2k = b2.reshape(H, 1).astype(jnp.float32)
    w3k = w3.reshape(H, 1).astype(jnp.float32)    # used on the VPU, keep f32
    b3k = b3.reshape(1).astype(jnp.float32)       # scalar, lives in SMEM

    grid = (Bp // block_b,)

    # Explicit VMEM budget: single-buffered weights + double-buffered x/out tiles
    # + h1/h2 intermediates, with 2x headroom for compiler scratch.
    weights_bytes = (H * D + H * H) * cdt_bytes + 3 * H * 128 * 4
    act_bytes = 4 * block_b * (2 * D + 2 * H + 2 * 8)
    vmem_limit = int(min(int(0.9 * vmem_capacity),
                         max(2 * (weights_bytes + act_bytes), 16 * 1024 * 1024)))

    wbytes = (H * D + H * H) * cdt_bytes + (3 * H + 1) * 4
    cost = pl.CostEstimate(
        flops=2 * Bp * (D * H + H * H + H),
        transcendentals=0,
        bytes_accessed=Bp * D * 4 + Bp * 4 + wbytes,
    )

    resident = pl.Buffered(1)                     # grid-invariant operands: 1 buffer

    out_t = pl.pallas_call(
        _mlp_kernel,
        out_shape=jax.ShapeDtypeStruct((1, Bp), jnp.float32),
        grid_spec=pltpu.PrefetchScalarGridSpec(
            num_scalar_prefetch=0,
            grid=grid,
            in_specs=[
                pl.BlockSpec((D, block_b), lambda i: (0, i)),        # x tile (lane-dense)
                pl.BlockSpec((H, D), lambda i: (0, 0), pipeline_mode=resident),   # W1
                pl.BlockSpec((H, 1), lambda i: (0, 0), pipeline_mode=resident),   # b1
                pl.BlockSpec((H, H), lambda i: (0, 0), pipeline_mode=resident),   # W2
                pl.BlockSpec((H, 1), lambda i: (0, 0), pipeline_mode=resident),   # b2
                pl.BlockSpec((H, 1), lambda i: (0, 0), pipeline_mode=resident),   # W3 column
                pl.BlockSpec(memory_space=pltpu.MemorySpace.SMEM),   # b3 scalar in SMEM
            ],
            out_specs=pl.BlockSpec((1, block_b), lambda i: (0, i)),  # lane-dense output slab
        ),
        compiler_params=pltpu.CompilerParams(
            dimension_semantics=("parallel",),
            vmem_limit_bytes=vmem_limit,
        ),
        cost_estimate=cost,
    )(x_t, w1k, b1k, w2k, b2k, w3k, b3k)

    return out_t.reshape(Bp, 1)[:B]               # free contiguous reshape, drop padding


def init_params(key, data_dim, hidden_dim):
    """torch.nn.Linear-style params: W (out, in), b (out,), uniform +-1/sqrt(fan_in)."""
    ks = jax.random.split(key, 6)

    def linear(kw, kb, fan_in, fan_out):
        bound = float(fan_in) ** -0.5
        w = jax.random.uniform(kw, (fan_out, fan_in), jnp.float32, -bound, bound)
        b = jax.random.uniform(kb, (fan_out,), jnp.float32, -bound, bound)
        return w, b

    w1, b1 = linear(ks[0], ks[1], data_dim, hidden_dim)
    w2, b2 = linear(ks[2], ks[3], hidden_dim, hidden_dim)
    w3, b3 = linear(ks[4], ks[5], hidden_dim, 1)
    return (w1, b1, w2, b2, w3, b3)


def mlp_ref(x, params, use_bf16=False):
    """Pure-JAX reference matching torch semantics (optionally with bf16 MXU operands)."""
    w1, b1, w2, b2, w3, b3 = params
    cdt = jnp.bfloat16 if use_bf16 else jnp.float32
    h1 = jnp.maximum(
        jnp.dot(x.astype(cdt), w1.astype(cdt).T, preferred_element_type=jnp.float32) + b1, 0.0)
    h2 = jnp.maximum(
        jnp.dot(h1.astype(cdt), w2.astype(cdt).T, preferred_element_type=jnp.float32) + b2, 0.0)
    return jnp.dot(h2, w3.T) + b3


if __name__ == "__main__":
    key = jax.random.PRNGKey(0)
    k_x, k_p = jax.random.split(key)

    B, data_dim, hidden_dim = 256, 32, 64     # small demo shapes; block_b=128 -> 2 grid steps
    x = jax.random.normal(k_x, (B, data_dim), jnp.float32)
    params = init_params(k_p, data_dim, hidden_dim)

    # f32 path: strict match against the pure-JAX reference.
    out_f32 = jax.block_until_ready(mlp_net(x, params, use_bf16=False))
    ref_f32 = mlp_ref(x, params, use_bf16=False)
    assert out_f32.shape == (B, 1)
    assert jnp.allclose(out_f32, ref_f32, atol=1e-4, rtol=1e-4), "f32 kernel mismatch vs reference"

    # bf16-operand MXU fast path (v6e/v7x): compare against a bf16-consistent reference.
    out_bf16 = jax.block_until_ready(mlp_net(x, params, use_bf16=True))
    ref_bf16 = mlp_ref(x, params, use_bf16=True)
    assert out_bf16.shape == (B, 1)
    assert jnp.allclose(out_bf16, ref_bf16, atol=2e-3, rtol=2e-3), "bf16 kernel mismatch vs reference"

    print("KERNEL_OK")
</pallas_src>

<mosaic_0001>
module attributes {stable_mosaic.version = 11 : i64} {
  func.func @_mlp_kernel(%arg0: i32, %arg1: memref<32x128xf32, #tpu.memory_space<vmem>>, %arg2: memref<64x32xf32, #tpu.memory_space<vmem>>, %arg3: memref<64x1xf32, #tpu.memory_space<vmem>>, %arg4: memref<64x64xf32, #tpu.memory_space<vmem>>, %arg5: memref<64x1xf32, #tpu.memory_space<vmem>>, %arg6: memref<64x1xf32, #tpu.memory_space<vmem>>, %arg7: memref<1xf32, #tpu.memory_space<smem>>, %arg8: memref<1x128xf32, #tpu.memory_space<vmem>>) attributes {dimension_semantics = [#tpu.dimension_semantics<parallel>], iteration_bounds = array<i64: 2>, scalar_prefetch = 0 : i64, scratch_operands = 0 : i64, tpu.core_type = #tpu.core_type<tc>, window_params = [{transform_indices = @transform_0, window_bounds = array<i64: 32, 128>}, {pipeline_mode = #tpu.pipeline_mode<synchronous>, transform_indices = @transform_1, window_bounds = array<i64: 64, 32>}, {pipeline_mode = #tpu.pipeline_mode<synchronous>, transform_indices = @transform_2, window_bounds = array<i64: 64, 1>}, {pipeline_mode = #tpu.pipeline_mode<synchronous>, transform_indices = @transform_3, window_bounds = array<i64: 64, 64>}, {pipeline_mode = #tpu.pipeline_mode<synchronous>, transform_indices = @transform_4, window_bounds = array<i64: 64, 1>}, {pipeline_mode = #tpu.pipeline_mode<synchronous>, transform_indices = @transform_5, window_bounds = array<i64: 64, 1>}, {transform_indices = @transform_6, window_bounds = array<i64: 1>}, {transform_indices = @transform_7, window_bounds = array<i64: 1, 128>}]} {
    %c0 = arith.constant 0 : index
    %c0_0 = arith.constant 0 : index
    %0 = vector.load %arg1[%c0, %c0_0] : memref<32x128xf32, #tpu.memory_space<vmem>>, vector<32x128xf32>
    %c0_1 = arith.constant 0 : index
    %c0_2 = arith.constant 0 : index
    %1 = vector.load %arg2[%c0_1, %c0_2] : memref<64x32xf32, #tpu.memory_space<vmem>>, vector<64x32xf32>
    %cst = arith.constant dense<0.000000e+00> : vector<64x128xf32>
    %2 = tpu.matmul %1, %0, %cst {dimension_numbers = #tpu.dot_dimension_numbers<[1], [0], [0], [1], [0, 0, 1, 1], [], []>} : vector<64x32xf32>, vector<32x128xf32>, vector<64x128xf32> -> vector<64x128xf32>
    %c0_3 = arith.constant 0 : index
    %c0_4 = arith.constant 0 : index
    %3 = vector.load %arg3[%c0_3, %c0_4] : memref<64x1xf32, #tpu.memory_space<vmem>>, vector<64x1xf32>
    %4 = vector.broadcast %3 : vector<64x1xf32> to vector<64x128xf32>
    %5 = arith.addf %2, %4 : vector<64x128xf32>
    %cst_5 = arith.constant 0.000000e+00 : f32
    %6 = vector.broadcast %cst_5 : f32 to vector<64x128xf32>
    %7 = arith.maximumf %5, %6 : vector<64x128xf32>
    %c0_6 = arith.constant 0 : index
    %c0_7 = arith.constant 0 : index
    %8 = vector.load %arg4[%c0_6, %c0_7] : memref<64x64xf32, #tpu.memory_space<vmem>>, vector<64x64xf32>
    %cst_8 = arith.constant dense<0.000000e+00> : vector<64x128xf32>
    %9 = tpu.matmul %8, %7, %cst_8 {dimension_numbers = #tpu.dot_dimension_numbers<[1], [0], [0], [1], [0, 0, 1, 1], [], []>} : vector<64x64xf32>, vector<64x128xf32>, vector<64x128xf32> -> vector<64x128xf32>
    %c0_9 = arith.constant 0 : index
    %c0_10 = arith.constant 0 : index
    %10 = vector.load %arg5[%c0_9, %c0_10] : memref<64x1xf32, #tpu.memory_space<vmem>>, vector<64x1xf32>
    %11 = vector.broadcast %10 : vector<64x1xf32> to vector<64x128xf32>
    %12 = arith.addf %9, %11 : vector<64x128xf32>
    %cst_11 = arith.constant 0.000000e+00 : f32
    %13 = vector.broadcast %cst_11 : f32 to vector<64x128xf32>
    %14 = arith.maximumf %12, %13 : vector<64x128xf32>
    %c0_12 = arith.constant 0 : index
    %c0_13 = arith.constant 0 : index
    %15 = vector.load %arg6[%c0_12, %c0_13] : memref<64x1xf32, #tpu.memory_space<vmem>>, vector<64x1xf32>
    %16 = vector.broadcast %15 : vector<64x1xf32> to vector<64x128xf32>
    %17 = arith.mulf %14, %16 : vector<64x128xf32>
    %cst_14 = arith.constant dense<0.000000e+00> : vector<128xf32>
    %18 = vector.multi_reduction <add>, %17, %cst_14 [0] : vector<64x128xf32> to vector<128xf32>
    %19 = vector.shape_cast %18 : vector<128xf32> to vector<1x128xf32>
    %c0_15 = arith.constant 0 : index
    %20 = memref.load %arg7[%c0_15] : memref<1xf32, #tpu.memory_space<smem>>
    %21 = vector.broadcast %20 : f32 to vector<1x128xf32>
    %22 = arith.addf %19, %21 : vector<1x128xf32>
    %c0_16 = arith.constant 0 : index
    %c0_17 = arith.constant 0 : index
    %23 = vector.load %arg8[%c0_16, %c0_17] : memref<1x128xf32, #tpu.memory_space<vmem>>, vector<1x128xf32>
    tpu.vector_store %arg8[%c0_16, %c0_17], %22 {strides = array<i32>} : memref<1x128xf32, #tpu.memory_space<vmem>>, vector<1x128xf32>,
    return
  }
  func.func @transform_0(%arg0: i32) -> (i32, i32) {
    %c0_i32 = arith.constant 0 : i32
    %c0_i32_0 = arith.constant 0 : i32
    return %c0_i32, %arg0 : i32, i32
  }
  func.func @transform_1(%arg0: i32) -> (i32, i32) {
    %c0_i32 = arith.constant 0 : i32
    %c0_i32_0 = arith.constant 0 : i32
    %c0_i32_1 = arith.constant 0 : i32
    return %c0_i32, %c0_i32_0 : i32, i32
  }
  func.func @transform_2(%arg0: i32) -> (i32, i32) {
    %c0_i32 = arith.constant 0 : i32
    %c0_i32_0 = arith.constant 0 : i32
    %c0_i32_1 = arith.constant 0 : i32
    return %c0_i32, %c0_i32_0 : i32, i32
  }
  func.func @transform_3(%arg0: i32) -> (i32, i32) {
    %c0_i32 = arith.constant 0 : i32
    %c0_i32_0 = arith.constant 0 : i32
    %c0_i32_1 = arith.constant 0 : i32
    return %c0_i32, %c0_i32_0 : i32, i32
  }
  func.func @transform_4(%arg0: i32) -> (i32, i32) {
    %c0_i32 = arith.constant 0 : i32
    %c0_i32_0 = arith.constant 0 : i32
    %c0_i32_1 = arith.constant 0 : i32
    return %c0_i32, %c0_i32_0 : i32, i32
  }
  func.func @transform_5(%arg0: i32) -> (i32, i32) {
    %c0_i32 = arith.constant 0 : i32
    %c0_i32_0 = arith.constant 0 : i32
    %c0_i32_1 = arith.constant 0 : i32
    return %c0_i32, %c0_i32_0 : i32, i32
  }
  func.func @transform_6(%arg0: i32) -> i32 {
    %c0_i32 = arith.constant 0 : i32
    %c0_i32_0 = arith.constant 0 : i32
    return %c0_i32 : i32
  }
  func.func @transform_7(%arg0: i32) -> (i32, i32) {
    %c0_i32 = arith.constant 0 : i32
    %c0_i32_0 = arith.constant 0 : i32
    return %c0_i32, %arg0 : i32, i32
  }
}

</mosaic_0001>

<llo_original>
// kernel: mlp_net.1
$region0: #{mlp_net.1}
  #allocation0 [shape = 'u32[]', space=smem, size = 0x4, offset = 0x4, fixed_abs, tag = 'smem constant byte address 0x4 - core index']
  #allocation1 [shape = 'u32[144,128]{1,0:T(1,128)}', space=vmem, size = 0x12000, scoped, tag = 'internal scratch']
  #allocation2 [shape = 'f32[1]{0:T(128)S(6)}', space=smem, size = 0x200, scoped, tag = 'scoped memory for mlp_net.1']
  %s0 = inlined_call_operand.vmem [shape: f32[32,256], index: 0, kind: input, shape index: {}]
  %s1 = inlined_call_operand.vmem [shape: f32[64,32], index: 1, kind: input, shape index: {}]
  %s2 = inlined_call_operand.vmem [shape: f32[64,1], index: 2, kind: input, shape index: {}]
  %s3 = inlined_call_operand.vmem [shape: f32[64,64], index: 3, kind: input, shape index: {}]
  %s4 = inlined_call_operand.vmem [shape: f32[64,1], index: 4, kind: input, shape index: {}]
  %s5 = inlined_call_operand.vmem [shape: f32[64,1], index: 5, kind: input, shape index: {}]
  %s6 = inlined_call_operand.<no memory space> [shape: f32[1], index: 6, kind: input, shape index: {}]
  %s7 = inlined_call_operand.hbm [shape: f32[1,256], index: 7, kind: output, shape index: {}]
  %s8 = sld [smem:[#allocation0]]
  $region99: #{mlp_net.1} parent=0
    _
  %s10 = ssub.s32 1, %s8
  %s11 = scalar_select 0, %s10, %s8
  %12 = sst [smem:[#allocation2]] %s6
  $region1: #{mlp_net.1} parent=0
    #allocation3 [shape = 'u8[32768]{0}', space=vmem, size = 0x8000, scoped, tag = 'input window, operand 0']
    #allocation4 [shape = 'u8[1024]{0}', space=vmem, size = 0x400, scoped, tag = 'output window, operand 0']
    #allocation5 [shape = 's32[2]{0}', space=sflag, size = 0x8, scoped, tag = 'scoped memory for mlp_net.1']
    %13 = vsyncpa [#allocation5], 0
    %s14 = scalar_lea.sflag [#allocation5], 1
    %15 = vsyncpa %s14, 0
    loop: start=0, step=1, limit=4
    $region2: #{mlp_net.1} parent=1 // loop_pre_header
      _
    $region3: #{mlp_net.1} parent=1 // loop_header
      %s17 = sphi 0, %s21
      %p18 = scmp.ge.s32.totalorder %s17, 4
      %s27 = sphi 0, %s29
      %s30 = sphi 0, %s27
      %s31 = sphi 0, %s30
      %s47 = sphi 0, %s31
      %s51 = sphi 0, %s51
      %s53 = sphi 0, %s51
      %s54 = sphi 0, %s53
      %s68 = sphi 0, %s54
      %s72 = sphi 0, %s72
      %s74 = sphi 0, %s72
      %s75 = sphi 0, %s74
      %s89 = sphi 0, %s75
      %s93 = sphi 0, %s93
      %s95 = sphi 0, %s93
      %s96 = sphi 0, %s95
      %s110 = sphi 0, %s96
      %s114 = sphi 0, %s114
      %s116 = sphi 0, %s114
      %s117 = sphi 0, %s116
      %s131 = sphi 0, %s117
      %s135 = sphi 0, %s135
      %s137 = sphi 0, %s135
      %s138 = sphi 0, %s137
      %s152 = sphi 0, %s138
      %s156 = sphi 0, %s156
      %s158 = sphi 0, %s156
      %s159 = sphi 0, %s158
      %s173 = sphi 0, %s159
      %s179 = sphi 0, %s181
      %s182 = sphi 0, %s179
      %s183 = sphi 0, %s182
      %s199 = sphi 0, %s183
    $region4: #{mlp_net.1} parent=1 // loop_header_branch
      %20 = sbr.rel (%p18) target = $region8
    $region5: #{mlp_net.1} parent=1 // loop_body
      %s22 = ssub.s32 %s17, 1
      %s23 = ssub.s32 %s17, 2
      %s24 = sadd.s32 %s17, 1
      %s25 = ssub.s32 %s17, %s24
      %p26 = scmp.eq.s32.totalorder %s25, 0
      %s28 = sadd.s32 %s27, 1
      %s29 = scalar_select %p26, %s27, %s28
      %p32 = pneg %p26
      %p33 = scmp.eq.s32.totalorder %s17, 1
      %p34 = por %p32, %p33
      %p35 = scmp.ne.s32.totalorder %s27, %s30
      %p36 = scmp.eq.s32.totalorder %s17, 0
      %p37 = por %p35, %p36
      %p38 = scmp.ne.s32.totalorder %s27, %s30
      %p39 = scmp.eq.s32.totalorder %s22, 1
      %p40 = por %p38, %p39
      %p41 = scmp.ne.s32.totalorder %s30, %s31
      %p42 = scmp.eq.s32.totalorder %s22, 0
      %p43 = por %p41, %p42
      %p44 = scmp.ne.s32.totalorder %s30, %s31
      %p45 = scmp.eq.s32.totalorder %s23, 1
      %p46 = por %p44, %p45
      %p48 = scmp.ne.s32.totalorder %s31, %s47
      %p49 = scmp.eq.s32.totalorder %s23, 0
      %p50 = por %p48, %p49
      %s52 = sadd.s32 %s51, 1
      %p55 = scmp.eq.s32.totalorder %s17, 1
      %p56 = scmp.ne.s32.totalorder %s51, %s53
      %p57 = scmp.eq.s32.totalorder %s17, 0
      %p58 = por %p56, %p57
      %p59 = scmp.ne.s32.totalorder %s51, %s53
      %p60 = scmp.eq.s32.totalorder %s22, 1
      %p61 = por %p59, %p60
      %p62 = scmp.ne.s32.totalorder %s53, %s54
      %p63 = scmp.eq.s32.totalorder %s22, 0
      %p64 = por %p62, %p63
      %p65 = scmp.ne.s32.totalorder %s53, %s54
      %p66 = scmp.eq.s32.totalorder %s23, 1
      %p67 = por %p65, %p66
      %p69 = scmp.ne.s32.totalorder %s54, %s68
      %p70 = scmp.eq.s32.totalorder %s23, 0
      %p71 = por %p69, %p70
      %s73 = sadd.s32 %s72, 1
      %p76 = scmp.eq.s32.totalorder %s17, 1
      %p77 = scmp.ne.s32.totalorder %s72, %s74
      %p78 = scmp.eq.s32.totalorder %s17, 0
      %p79 = por %p77, %p78
      %p80 = scmp.ne.s32.totalorder %s72, %s74
      %p81 = scmp.eq.s32.totalorder %s22, 1
      %p82 = por %p80, %p81
      %p83 = scmp.ne.s32.totalorder %s74, %s75
      %p84 = scmp.eq.s32.totalorder %s22, 0
      %p85 = por %p83, %p84
      %p86 = scmp.ne.s32.totalorder %s74, %s75
      %p87 = scmp.eq.s32.totalorder %s23, 1
      %p88 = por %p86, %p87
      %p90 = scmp.ne.s32.totalorder %s75, %s89
      %p91 = scmp.eq.s32.totalorder %s23, 0
      %p92 = por %p90, %p91
      %s94 = sadd.s32 %s93, 1
      %p97 = scmp.eq.s32.totalorder %s17, 1
      %p98 = scmp.ne.s32.totalorder %s93, %s95
      %p99 = scmp.eq.s32.totalorder %s17, 0
      %p100 = por %p98, %p99
      %p101 = scmp.ne.s32.totalorder %s93, %s95
      %p102 = scmp.eq.s32.totalorder %s22, 1
      %p103 = por %p101, %p102
      %p104 = scmp.ne.s32.totalorder %s95, %s96
      %p105 = scmp.eq.s32.totalorder %s22, 0
      %p106 = por %p104, %p105
      %p107 = scmp.ne.s32.totalorder %s95, %s96
      %p108 = scmp.eq.s32.totalorder %s23, 1
      %p109 = por %p107, %p108
      %p111 = scmp.ne.s32.totalorder %s96, %s110
      %p112 = scmp.eq.s32.totalorder %s23, 0
      %p113 = por %p111, %p112
      %s115 = sadd.s32 %s114, 1
      %p118 = scmp.eq.s32.totalorder %s17, 1
      %p119 = scmp.ne.s32.totalorder %s114, %s116
      %p120 = scmp.eq.s32.totalorder %s17, 0
      %p121 = por %p119, %p120
      %p122 = scmp.ne.s32.totalorder %s114, %s116
      %p123 = scmp.eq.s32.totalorder %s22, 1
      %p124 = por %p122, %p123
      %p125 = scmp.ne.s32.totalorder %s116, %s117
      %p126 = scmp.eq.s32.totalorder %s22, 0
      %p127 = por %p125, %p126
      %p128 = scmp.ne.s32.totalorder %s116, %s117
      %p129 = scmp.eq.s32.totalorder %s23, 1
      %p130 = por %p128, %p129
      %p132 = scmp.ne.s32.totalorder %s117, %s131
      %p133 = scmp.eq.s32.totalorder %s23, 0
      %p134 = por %p132, %p133
      %s136 = sadd.s32 %s135, 1
      %p139 = scmp.eq.s32.totalorder %s17, 1
      %p140 = scmp.ne.s32.totalorder %s135, %s137
      %p141 = scmp.eq.s32.totalorder %s17, 0
      %p142 = por %p140, %p141
      %p143 = scmp.ne.s32.totalorder %s135, %s137
      %p144 = scmp.eq.s32.totalorder %s22, 1
      %p145 = por %p143, %p144
      %p146 = scmp.ne.s32.totalorder %s137, %s138
      %p147 = scmp.eq.s32.totalorder %s22, 0
      %p148 = por %p146, %p147
      %p149 = scmp.ne.s32.totalorder %s137, %s138
      %p150 = scmp.eq.s32.totalorder %s23, 1
      %p151 = por %p149, %p150
      %p153 = scmp.ne.s32.totalorder %s138, %s152
      %p154 = scmp.eq.s32.totalorder %s23, 0
      %p155 = por %p153, %p154
      %s157 = sadd.s32 %s156, 1
      %p160 = scmp.eq.s32.totalorder %s17, 1
      %p161 = scmp.ne.s32.totalorder %s156, %s158
      %p162 = scmp.eq.s32.totalorder %s17, 0
      %p163 = por %p161, %p162
      %p164 = scmp.ne.s32.totalorder %s156, %s158
      %p165 = scmp.eq.s32.totalorder %s22, 1
      %p166 = por %p164, %p165
      %p167 = scmp.ne.s32.totalorder %s158, %s159
      %p168 = scmp.eq.s32.totalorder %s22, 0
      %p169 = por %p167, %p168
      %p170 = scmp.ne.s32.totalorder %s158, %s159
      %p171 = scmp.eq.s32.totalorder %s23, 1
      %p172 = por %p170, %p171
      %p174 = scmp.ne.s32.totalorder %s159, %s173
      %p175 = scmp.eq.s32.totalorder %s23, 0
      %p176 = por %p174, %p175
      %s177 = ssub.s32 %s17, %s24
      %p178 = scmp.eq.s32.totalorder %s177, 0
      %s180 = sadd.s32 %s179, 1
      %s181 = scalar_select %p178, %s179, %s180
      %p184 = pneg %p178
      %p185 = scmp.eq.s32.totalorder %s17, 1
      %p186 = por %p184, %p185
      %p187 = scmp.ne.s32.totalorder %s179, %s182
      %p188 = scmp.eq.s32.totalorder %s17, 0
      %p189 = por %p187, %p188
      %p190 = scmp.ne.s32.totalorder %s179, %s182
      %p191 = scmp.eq.s32.totalorder %s22, 1
      %p192 = por %p190, %p191
      %p193 = scmp.ne.s32.totalorder %s182, %s183
      %p194 = scmp.eq.s32.totalorder %s22, 0
      %p195 = por %p193, %p194
      %p196 = scmp.ne.s32.totalorder %s182, %s183
      %p197 = scmp.eq.s32.totalorder %s23, 1
      %p198 = por %p196, %p197
      %p200 = scmp.ne.s32.totalorder %s183, %s199
      %p201 = scmp.eq.s32.totalorder %s23, 0
      %p202 = por %p200, %p201
      %p203 = scmp.le.s32.totalorder 1, %s17
      %p204 = scmp.lt.s32.totalorder %s17, 3
      %p205 = pnand %p203, %p204
      %p206 = pneg %p205
      // Predicated region
      $region9: #{mlp_net.1} parent=5 // pred_check
        _
      $region10: #{mlp_net.1} parent=5 // pred_check_branch
        %208 = sbr.rel (%p205) target = $region12
      $region11: #{mlp_net.1} parent=5 // pred_region
        %s209 = ssub.s32 %s17, 1
        // Predicated region
        $region13: #{mlp_net.1} parent=11 // pred_check
          %p210 = pneg %p64
        $region14: #{mlp_net.1} parent=11 // pred_check_branch
          %212 = sbr.rel (%p210) target = $region16
        $region15: #{mlp_net.1} parent=11 // pred_region
          _
        $region16: #{mlp_net.1} parent=11 // pred_fallthru
          _
        // Predicated region
        $region17: #{mlp_net.1} parent=11 // pred_check
          %p213 = pneg %p85
        $region18: #{mlp_net.1} parent=11 // pred_check_branch
          %215 = sbr.rel (%p213) target = $region20
        $region19: #{mlp_net.1} parent=11 // pred_region
          _
        $region20: #{mlp_net.1} parent=11 // pred_fallthru
          _
        // Predicated region
        $region21: #{mlp_net.1} parent=11 // pred_check
          %p216 = pneg %p106
        $region22: #{mlp_net.1} parent=11 // pred_check_branch
          %218 = sbr.rel (%p216) target = $region24
        $region23: #{mlp_net.1} parent=11 // pred_region
          _
        $region24: #{mlp_net.1} parent=11 // pred_fallthru
          _
        // Predicated region
        $region25: #{mlp_net.1} parent=11 // pred_check
          %p219 = pneg %p127
        $region26: #{mlp_net.1} parent=11 // pred_check_branch
          %221 = sbr.rel (%p219) target = $region28
        $region27: #{mlp_net.1} parent=11 // pred_region
          _
        $region28: #{mlp_net.1} parent=11 // pred_fallthru
          _
        // Predicated region
        $region29: #{mlp_net.1} parent=11 // pred_check
          %p222 = pneg %p148
        $region30: #{mlp_net.1} parent=11 // pred_check_branch
          %224 = sbr.rel (%p222) target = $region32
        $region31: #{mlp_net.1} parent=11 // pred_region
          _
        $region32: #{mlp_net.1} parent=11 // pred_fallthru
          _
        // Predicated region
        $region33: #{mlp_net.1} parent=11 // pred_check
          %p225 = pneg %p169
        $region34: #{mlp_net.1} parent=11 // pred_check_branch
          %227 = sbr.rel (%p225) target = $region36
        $region35: #{mlp_net.1} parent=11 // pred_region
          _
        $region36: #{mlp_net.1} parent=11 // pred_fallthru
          _
      $region12: #{mlp_net.1} parent=5 // pred_fallthru
        _
      %p228 = scmp.lt.s32.totalorder %s17, 2
      // Predicated region
      $region37: #{mlp_net.1} parent=5 // pred_check
        %p229 = pneg %p228
      $region38: #{mlp_net.1} parent=5 // pred_check_branch
        %231 = sbr.rel (%p229) target = $region40
      $region39: #{mlp_net.1} parent=5 // pred_region
        // Predicated region
        $region41: #{mlp_net.1} parent=39 // pred_check
          %p232 = pneg %p37
        $region42: #{mlp_net.1} parent=39 // pred_check_branch
          %234 = sbr.rel (%p232) target = $region44
        $region43: #{mlp_net.1} parent=39 // pred_region
          %s235 = sand.u32 %s27, 1
          %s236 = sand.u32 %s27, 1
          %s237 = smul.addr %s236, 32
          %s238 = scalar_lea.vmem [#allocation3], %s237
          %s239 = smul.addr %s17, 8
          %s240 = scalar_lea.vmem %s0, %s239
          // Predicated region
          $region45: #{mlp_net.1} parent=43 // pred_check
            _
          $region46: #{mlp_net.1} parent=43 // pred_check_branch
            %242 = sbr.rel (0) target = $region48
          $region47: #{mlp_net.1} parent=43 // pred_region
            // Predicated region
            $region49: #{mlp_net.1} parent=47 // pred_check
              _
            $region50: #{mlp_net.1} parent=47 // pred_check_branch
              %244 = sbr.rel (0) target = $region52
            $region51: #{mlp_net.1} parent=47 // pred_region
              // Predicated region
              $region64: #{mlp_net.1} parent=51 // pred_check
                _
              $region65: #{mlp_net.1} parent=51 // pred_check_branch
                %265 = sbr.rel (0) target = $region67
              $region66: #{mlp_net.1} parent=51 // pred_region
                loop: start=0, step=1, limit=1
                $region68: #{mlp_net.1} parent=66 // loop_pre_header
                  _
                $region69: #{mlp_net.1} parent=66 // loop_header
                  %s267 = sphi 0, %s271
                  %p268 = scmp.ge.s32.totalorder %s267, 1
                  %s272 = sphi %s240, %s240
                  %s273 = sphi %s238, %s238
                $region70: #{mlp_net.1} parent=66 // loop_header_branch
                  %270 = sbr.rel (%p268) target = $region74
                $region71: #{mlp_net.1} parent=66 // loop_body
                  %v274 = vld [vmem:[%s272] sm:$0xff]
                  %275 = vst [vmem:[%s273] sm:$0xff] %v274
                  %v276 = vld [vmem:[%s272 + $0x10] sm:$0xff]
                  %277 = vst [vmem:[%s273 + $0x8] sm:$0xff] %v276
                  %v278 = vld [vmem:[%s272 + $0x20] sm:$0xff]
                  %279 = vst [vmem:[%s273 + $0x10] sm:$0xff] %v278
                  %v280 = vld [vmem:[%s272 + $0x30] sm:$0xff]
                  %281 = vst [vmem:[%s273 + $0x18] sm:$0xff] %v280
                $region72: #{mlp_net.1} parent=66 // loop_footer
                  %s271 = sadd.s32 1, %s267
                $region73: #{mlp_net.1} parent=66 // loop_footer_branch
                  %266 = sbr.rel target = $region69
                $region74: #{mlp_net.1} parent=66 // loop_exit
                  _
              $region67: #{mlp_net.1} parent=51 // pred_fallthru
                _
              // Predicated region
              $region75: #{mlp_net.1} parent=51 // pred_check
                _
              $region76: #{mlp_net.1} parent=51 // pred_check_branch
                %283 = sbr.rel target = $region78
              $region77: #{mlp_net.1} parent=51 // pred_region
                _
              $region78: #{mlp_net.1} parent=51 // pred_fallthru
                _
            $region52: #{mlp_net.1} parent=47 // pred_fallthru
              _
            // Predicated region
            $region53: #{mlp_net.1} parent=47 // pred_check
              _
            $region54: #{mlp_net.1} parent=47 // pred_check_branch
              %246 = sbr.rel target = $region56
            $region55: #{mlp_net.1} parent=47 // pred_region
              loop: start=0, step=1, limit=1
              $region57: #{mlp_net.1} parent=55 // loop_pre_header
                _
              $region58: #{mlp_net.1} parent=55 // loop_header
                %s249 = sphi 0, %s253
                %p250 = scmp.ge.s32.totalorder %s249, 1
                %s254 = sphi %s240, %s240
                %s255 = sphi %s238, %s238
              $region59: #{mlp_net.1} parent=55 // loop_header_branch
                %252 = sbr.rel (%p250) target = $region63
              $region60: #{mlp_net.1} parent=55 // loop_body
                %v256 = vld [vmem:[%s254] sm:$0xff]
                %257 = vst [vmem:[%s255] sm:$0xff] %v256
                %v258 = vld [vmem:[%s254 + $0x10] sm:$0xff]
                %259 = vst [vmem:[%s255 + $0x8] sm:$0xff] %v258
                %v260 = vld [vmem:[%s254 + $0x20] sm:$0xff]
                %261 = vst [vmem:[%s255 + $0x10] sm:$0xff] %v260
                %v262 = vld [vmem:[%s254 + $0x30] sm:$0xff]
                %263 = vst [vmem:[%s255 + $0x18] sm:$0xff] %v262
              $region61: #{mlp_net.1} parent=55 // loop_footer
                %s253 = sadd.s32 1, %s249
              $region62: #{mlp_net.1} parent=55 // loop_footer_branch
                %248 = sbr.rel target = $region58
              $region63: #{mlp_net.1} parent=55 // loop_exit
                _
            $region56: #{mlp_net.1} parent=47 // pred_fallthru
              _
          $region48: #{mlp_net.1} parent=43 // pred_fallthru
            _
          %284 = vnop
        $region44: #{mlp_net.1} parent=39 // pred_fallthru
          _
      $region40: #{mlp_net.1} parent=5 // pred_fallthru
        _
      %p285 = scmp.le.s32.totalorder 1, %s17
      %p286 = scmp.lt.s32.totalorder %s17, 3
      %p287 = pnand %p285, %p286
      %p288 = pneg %p287
      // Predicated region
      $region79: #{mlp_net.1} parent=5 // pred_check
        _
      $region80: #{mlp_net.1} parent=5 // pred_check_branch
        %290 = sbr.rel (%p287) target = $region82
      $region81: #{mlp_net.1} parent=5 // pred_region
        %s291 = ssub.s32 %s17, 1
        %s292 = sand.u32 %s30, 1
        %s293 = sand.u32 %s30, 1
        %s294 = smul.addr %s293, 32
        %s295 = scalar_lea.vmem [#allocation3], %s294
        // Predicated region
        $region83: #{mlp_net.1} parent=81 // pred_check
          %p296 = pneg %p43
        $region84: #{mlp_net.1} parent=81 // pred_check_branch
          %298 = sbr.rel (%p296) target = $region86
        $region85: #{mlp_net.1} parent=81 // pred_region
          _
        $region86: #{mlp_net.1} parent=81 // pred_fallthru
          _
        %s299 = sand.u32 %s30, 1
        %s300 = sand.u32 %s30, 1
        %s301 = smul.addr %s300, 32
        %s302 = scalar_lea.vmem [#allocation3], %s301
        %p303 = pneg %p43
        %p304 = pneg %p40
        %p305 = pneg %p64
        %p306 = pneg %p61
        %p307 = pneg %p85
        %p308 = pneg %p82
        %p309 = pneg %p106
        %p310 = pneg %p103
        %p311 = pneg %p127
        %p312 = pneg %p124
        %p313 = pneg %p148
        %p314 = pneg %p145
        %p315 = pneg %p169
        %p316 = pneg %p166
        %p317 = pneg %p195
        %p318 = pneg %p192
        %s319 = sand.u32 %s182, 1
        %s320 = scalar_lea.sflag [#allocation5], %s319
        %s321 = sand.u32 %s182, 1
        %s322 = scalar_lea.vmem [#allocation4], %s321
        %v323 = vld [vmem:[%s295] sm:$0xff]
        %v324 = vld [vmem:[%s295 + $0x8] sm:$0xff]
        %v325 = vld [vmem:[%s295 + $0x10] sm:$0xff]
        %v326 = vld [vmem:[%s295 + $0x18] sm:$0xff]
        %v327 = vld [vmem:[%s1] sm:$0xff]
        %v328 = vld [vmem:[%s1 + $0x8] sm:$0xff]
        %v329 = vld [vmem:[%s1 + $0x10] sm:$0xff]
        %v330 = vld [vmem:[%s1 + $0x18] sm:$0xff]
        %v331 = vld [vmem:[%s1 + $0x20] sm:$0xff]
        %v332 = vld [vmem:[%s1 + $0x28] sm:$0xff]
        %v333 = vld [vmem:[%s1 + $0x30] sm:$0xff]
        %v334 = vld [vmem:[%s1 + $0x38] sm:$0xff]
        %v335 = vld [vmem:[%s2] sm:$0xff]
        %v336 = vld [vmem:[%s2 + $0x8] sm:$0xff]
        %v337 = vld [vmem:[%s2 + $0x10] sm:$0xff]
        %v338 = vld [vmem:[%s2 + $0x18] sm:$0xff]
        %v339 = vld [vmem:[%s2 + $0x20] sm:$0xff]
        %v340 = vld [vmem:[%s2 + $0x28] sm:$0xff]
        %v341 = vld [vmem:[%s2 + $0x30] sm:$0xff]
        %v342 = vld [vmem:[%s2 + $0x38] sm:$0xff]
        %344 = vset.pattern.permute.xlu0 0
        %345 = vperm.xlu0 %344, %v335
        %v346 = vpop.permute.xlu0 %345
        %349 = vset.pattern.permute.xlu0 0
        %350 = vperm.xlu0 %349, %v336
        %v351 = vpop.permute.xlu0 %350
        %354 = vset.pattern.permute.xlu0 0
        %355 = vperm.xlu0 %354, %v337
        %v356 = vpop.permute.xlu0 %355
        %359 = vset.pattern.permute.xlu0 0
        %360 = vperm.xlu0 %359, %v338
        %v361 = vpop.permute.xlu0 %360
        %364 = vset.pattern.permute.xlu0 0
        %365 = vperm.xlu0 %364, %v339
        %v366 = vpop.permute.xlu0 %365
        %369 = vset.pattern.permute.xlu0 0
        %370 = vperm.xlu0 %369, %v340
        %v371 = vpop.permute.xlu0 %370
        %374 = vset.pattern.permute.xlu0 0
        %375 = vperm.xlu0 %374, %v341
        %v376 = vpop.permute.xlu0 %375
        %379 = vset.pattern.permute.xlu0 0
        %380 = vperm.xlu0 %379, %v342
        %v381 = vpop.permute.xlu0 %380
        %vm383 = vcmask 261120
        %v385 = vsel %vm383, %v327, 0
        %v388 = vsel %vm383, %v328, 0
        %v391 = vsel %vm383, %v329, 0
        %v394 = vsel %vm383, %v330, 0
        %v397 = vsel %vm383, %v331, 0
        %v400 = vsel %vm383, %v332, 0
        %v403 = vsel %vm383, %v333, 0
        %v406 = vsel %vm383, %v334, 0
        %408 = vmatprep.subr.mxu0 0.0
        %409 = vmatpush1.msra.mxu0 %v323
        %410 = vmatprep.subr.mxu0 0.0
        %411 = vmatpush1.msra.mxu0 %v324
        %412 = vmatprep.subr.mxu0 0.0
        %413 = vmatpush1.msra.mxu0 %v325
        %414 = vmatprep.subr.mxu0 0.0
        %415 = vmatpush1.msra.mxu0 %v326
        %416 = vmatprep.subr.mxu0 0.0
        %417 = vmatpush1.msra.mxu0 0.0
        %418 = vmatprep.subr.mxu0 0.0
        %419 = vmatpush1.msra.mxu0 0.0
        %420 = vmatprep.subr.mxu0 0.0
        %421 = vmatpush1.msra.mxu0 0.0
        %422 = vmatprep.subr.mxu0 0.0
        %423 = vmatpush1.msra.mxu0 0.0
        %424 = vmatprep.subr.mxu0 0.0
        %425 = vmatpush1.msra.mxu0 0.0
        %426 = vmatprep.subr.mxu0 0.0
        %427 = vmatpush1.msra.mxu0 0.0
        %428 = vmatprep.subr.mxu0 0.0
        %429 = vmatpush1.msra.mxu0 0.0
        %430 = vmatprep.subr.mxu0 0.0
        %431 = vmatpush1.msra.mxu0 0.0
        %432 = vmatprep.subr.mxu0 0.0
        %433 = vmatpush1.msra.mxu0 0.0
        %434 = vmatprep.subr.mxu0 0.0
        %435 = vmatpush1.msra.mxu0 0.0
        %436 = vmatprep.subr.mxu0 0.0
        %437 = vmatpush1.msra.mxu0 0.0
        %438 = vmatprep.subr.mxu0 0.0
        %439 = vmatpush1.msra.mxu0 0.0
        %440 = vmatprep.subr.mxu0 0.0
        %441 = vmatpush1.msra.mxu0 0.0
        %442 = vmatprep.subr.mxu0 0.0
        %443 = vmatpush1.msra.mxu0 0.0
        %444 = vmatprep.subr.mxu0 0.0
        %445 = vmatpush1.msra.mxu0 0.0
        %446 = vmatprep.subr.mxu0 0.0
        %447 = vmatpush1.msra.mxu0 0.0
        %448 = vmatprep.subr.mxu0 0.0
        %449 = vmatpush1.msra.mxu0 0.0
        %450 = vmatprep.subr.mxu0 0.0
        %451 = vmatpush1.msra.mxu0 0.0
        %452 = vmatprep.subr.mxu0 0.0
        %453 = vmatpush1.msra.mxu0 0.0
        %454 = vmatprep.subr.mxu0 0.0
        %455 = vmatpush1.msra.mxu0 0.0
        %456 = vmatprep.subr.mxu0 0.0
        %457 = vmatpush1.msra.mxu0 0.0
        %458 = vmatprep.subr.mxu0 0.0
        %459 = vmatpush1.msra.mxu0 0.0
        %460 = vmatprep.subr.mxu0 0.0
        %461 = vmatpush1.msra.mxu0 0.0
        %462 = vmatprep.subr.mxu0 0.0
        %463 = vmatpush1.msra.mxu0 0.0
        %464 = vmatprep.subr.mxu0 0.0
        %465 = vmatpush1.msra.mxu0 0.0
        %466 = vmatprep.subr.mxu0 0.0
        %467 = vmatpush1.msra.mxu0 0.0
        %468 = vmatprep.subr.mxu0 0.0
        %469 = vmatpush1.msra.mxu0 0.0
        %470 = vmatprep.subr.mxu0 0.0
        %471 = vmatpush1.msra.mxu0 0.0
        %472 = vmatprep.mubr.f32.mxu0 0.0
        %473 = vmatmul.mubr.f32.gmra.mrb[0].mxu0 %v385
        %v474 = vpop.f32.mrb[0].mxu0
        %v475 = vadd.f32 %v346, %v474
        %v476 = vpop.f32.mrb[0].mxu0
        %477 = vmatprep.mubr.f32.mxu0 0.0
        %478 = vmatmul.mubr.f32.gmra.mrb[0].mxu0 %v388
        %v479 = vpop.f32.mrb[0].mxu0
        %v480 = vadd.f32 %v351, %v479
        %v481 = vpop.f32.mrb[0].mxu0
        %482 = vmatprep.mubr.f32.mxu0 0.0
        %483 = vmatmul.mubr.f32.gmra.mrb[0].mxu0 %v391
        %v484 = vpop.f32.mrb[0].mxu0
        %v485 = vadd.f32 %v356, %v484
        %v486 = vpop.f32.mrb[0].mxu0
        %487 = vmatprep.mubr.f32.mxu0 0.0
        %488 = vmatmul.mubr.f32.gmra.mrb[0].mxu0 %v394
        %v489 = vpop.f32.mrb[0].mxu0
        %v490 = vadd.f32 %v361, %v489
        %v491 = vpop.f32.mrb[0].mxu0
        %492 = vmatprep.mubr.f32.mxu0 0.0
        %493 = vmatmul.mubr.f32.gmra.mrb[0].mxu0 %v397
        %v494 = vpop.f32.mrb[0].mxu0
        %v495 = vadd.f32 %v366, %v494
        %v496 = vpop.f32.mrb[0].mxu0
        %497 = vmatprep.mubr.f32.mxu0 0.0
        %498 = vmatmul.mubr.f32.gmra.mrb[0].mxu0 %v400
        %v499 = vpop.f32.mrb[0].mxu0
        %v500 = vadd.f32 %v371, %v499
        %v501 = vpop.f32.mrb[0].mxu0
        %502 = vmatprep.mubr.f32.mxu0 0.0
        %503 = vmatmul.mubr.f32.gmra.mrb[0].mxu0 %v403
        %v504 = vpop.f32.mrb[0].mxu0
        %v505 = vadd.f32 %v376, %v504
        %v506 = vpop.f32.mrb[0].mxu0
        %507 = vmatprep.mubr.f32.mxu0 0.0
        %508 = vmatmul.mubr.f32.gmra.mrb[0].mxu0 %v406
        %v509 = vpop.f32.mrb[0].mxu0
        %v510 = vadd.f32 %v381, %v509
        %v511 = vpop.f32.mrb[0].mxu0
        %512 = vdwg.mxu0
        %v513 = vmax.f32 %v475, 0.0
        %v514 = vmax.f32 %v480, 0.0
        %v515 = vmax.f32 %v485, 0.0
        %v516 = vmax.f32 %v490, 0.0
        %v517 = vmax.f32 %v495, 0.0
        %v518 = vmax.f32 %v500, 0.0
        %v519 = vmax.f32 %v505, 0.0
        %v520 = vmax.f32 %v510, 0.0
        %v521 = vld [vmem:[%s3] sm:$0xff]
        %v522 = vld [vmem:[%s3 + $0x8] sm:$0xff]
        %v523 = vld [vmem:[%s3 + $0x10] sm:$0xff]
        %v524 = vld [vmem:[%s3 + $0x18] sm:$0xff]
        %v525 = vld [vmem:[%s3 + $0x20] sm:$0xff]
        %v526 = vld [vmem:[%s3 + $0x28] sm:$0xff]
        %v527 = vld [vmem:[%s3 + $0x30] sm:$0xff]
        %v528 = vld [vmem:[%s3 + $0x38] sm:$0xff]
        %v529 = vld [vmem:[%s4] sm:$0xff]
        %v530 = vld [vmem:[%s4 + $0x8] sm:$0xff]
        %v531 = vld [vmem:[%s4 + $0x10] sm:$0xff]
        %v532 = vld [vmem:[%s4 + $0x18] sm:$0xff]
        %v533 = vld [vmem:[%s4 + $0x20] sm:$0xff]
        %v534 = vld [vmem:[%s4 + $0x28] sm:$0xff]
        %v535 = vld [vmem:[%s4 + $0x30] sm:$0xff]
        %v536 = vld [vmem:[%s4 + $0x38] sm:$0xff]
        %538 = vset.pattern.permute.xlu0 0
        %539 = vperm.xlu0 %538, %v529
        %v540 = vpop.permute.xlu0 %539
        %543 = vset.pattern.permute.xlu0 0
        %544 = vperm.xlu0 %543, %v530
        %v545 = vpop.permute.xlu0 %544
        %548 = vset.pattern.permute.xlu0 0
        %549 = vperm.xlu0 %548, %v531
        %v550 = vpop.permute.xlu0 %549
        %553 = vset.pattern.permute.xlu0 0
        %554 = vperm.xlu0 %553, %v532
        %v555 = vpop.permute.xlu0 %554
        %558 = vset.pattern.permute.xlu0 0
        %559 = vperm.xlu0 %558, %v533
        %v560 = vpop.permute.xlu0 %559
        %563 = vset.pattern.permute.xlu0 0
        %564 = vperm.xlu0 %563, %v534
        %v565 = vpop.permute.xlu0 %564
        %568 = vset.pattern.permute.xlu0 0
        %569 = vperm.xlu0 %568, %v535
        %v570 = vpop.permute.xlu0 %569
        %573 = vset.pattern.permute.xlu0 0
        %574 = vperm.xlu0 %573, %v536
        %v575 = vpop.permute.xlu0 %574
        %vm577 = vcmask 523264
        %v579 = vsel %vm577, %v521, 0
        %v582 = vsel %vm577, %v522, 0
        %v585 = vsel %vm577, %v523, 0
        %v588 = vsel %vm577, %v524, 0
        %v591 = vsel %vm577, %v525, 0
        %v594 = vsel %vm577, %v526, 0
        %v597 = vsel %vm577, %v527, 0
        %v600 = vsel %vm577, %v528, 0
        %602 = vmatprep.subr.mxu0 0.0
        %603 = vmatpush1.msra.mxu0 %v513
        %604 = vmatprep.subr.mxu0 0.0
        %605 = vmatpush1.msra.mxu0 %v514
        %606 = vmatprep.subr.mxu0 0.0
        %607 = vmatpush1.msra.mxu0 %v515
        %608 = vmatprep.subr.mxu0 0.0
        %609 = vmatpush1.msra.mxu0 %v516
        %610 = vmatprep.subr.mxu0 0.0
        %611 = vmatpush1.msra.mxu0 %v517
        %612 = vmatprep.subr.mxu0 0.0
        %613 = vmatpush1.msra.mxu0 %v518
        %614 = vmatprep.subr.mxu0 0.0
        %615 = vmatpush1.msra.mxu0 %v519
        %616 = vmatprep.subr.mxu0 0.0
        %617 = vmatpush1.msra.mxu0 %v520
        %618 = vmatprep.subr.mxu0 0.0
        %619 = vmatpush1.msra.mxu0 0.0
        %620 = vmatprep.subr.mxu0 0.0
        %621 = vmatpush1.msra.mxu0 0.0
        %622 = vmatprep.subr.mxu0 0.0
        %623 = vmatpush1.msra.mxu0 0.0
        %624 = vmatprep.subr.mxu0 0.0
        %625 = vmatpush1.msra.mxu0 0.0
        %626 = vmatprep.subr.mxu0 0.0
        %627 = vmatpush1.msra.mxu0 0.0
        %628 = vmatprep.subr.mxu0 0.0
        %629 = vmatpush1.msra.mxu0 0.0
        %630 = vmatprep.subr.mxu0 0.0
        %631 = vmatpush1.msra.mxu0 0.0
        %632 = vmatprep.subr.mxu0 0.0
        %633 = vmatpush1.msra.mxu0 0.0
        %634 = vmatprep.subr.mxu0 0.0
        %635 = vmatpush1.msra.mxu0 0.0
        %636 = vmatprep.subr.mxu0 0.0
        %637 = vmatpush1.msra.mxu0 0.0
        %638 = vmatprep.subr.mxu0 0.0
        %639 = vmatpush1.msra.mxu0 0.0
        %640 = vmatprep.subr.mxu0 0.0
        %641 = vmatpush1.msra.mxu0 0.0
        %642 = vmatprep.subr.mxu0 0.0
        %643 = vmatpush1.msra.mxu0 0.0
        %644 = vmatprep.subr.mxu0 0.0
        %645 = vmatpush1.msra.mxu0 0.0
        %646 = vmatprep.subr.mxu0 0.0
        %647 = vmatpush1.msra.mxu0 0.0
        %648 = vmatprep.subr.mxu0 0.0
        %649 = vmatpush1.msra.mxu0 0.0
        %650 = vmatprep.subr.mxu0 0.0
        %651 = vmatpush1.msra.mxu0 0.0
        %652 = vmatprep.subr.mxu0 0.0
        %653 = vmatpush1.msra.mxu0 0.0
        %654 = vmatprep.subr.mxu0 0.0
        %655 = vmatpush1.msra.mxu0 0.0
        %656 = vmatprep.subr.mxu0 0.0
        %657 = vmatpush1.msra.mxu0 0.0
        %658 = vmatprep.subr.mxu0 0.0
        %659 = vmatpush1.msra.mxu0 0.0
        %660 = vmatprep.subr.mxu0 0.0
        %661 = vmatpush1.msra.mxu0 0.0
        %662 = vmatprep.subr.mxu0 0.0
        %663 = vmatpush1.msra.mxu0 0.0
        %664 = vmatprep.subr.mxu0 0.0
        %665 = vmatpush1.msra.mxu0 0.0
        %666 = vmatprep.mubr.f32.mxu0 0.0
        %667 = vmatmul.mubr.f32.gmra.mrb[0].mxu0 %v579
        %v668 = vpop.f32.mrb[0].mxu0
        %v669 = vadd.f32 %v540, %v668
        %v670 = vpop.f32.mrb[0].mxu0
        %671 = vmatprep.mubr.f32.mxu0 0.0
        %672 = vmatmul.mubr.f32.gmra.mrb[0].mxu0 %v582
        %v673 = vpop.f32.mrb[0].mxu0
        %v674 = vadd.f32 %v545, %v673
        %v675 = vpop.f32.mrb[0].mxu0
        %676 = vmatprep.mubr.f32.mxu0 0.0
        %677 = vmatmul.mubr.f32.gmra.mrb[0].mxu0 %v585
        %v678 = vpop.f32.mrb[0].mxu0
        %v679 = vadd.f32 %v550, %v678
        %v680 = vpop.f32.mrb[0].mxu0
        %681 = vmatprep.mubr.f32.mxu0 0.0
        %682 = vmatmul.mubr.f32.gmra.mrb[0].mxu0 %v588
        %v683 = vpop.f32.mrb[0].mxu0
        %v684 = vadd.f32 %v555, %v683
        %v685 = vpop.f32.mrb[0].mxu0
        %686 = vmatprep.mubr.f32.mxu0 0.0
        %687 = vmatmul.mubr.f32.gmra.mrb[0].mxu0 %v591
        %v688 = vpop.f32.mrb[0].mxu0
        %v689 = vadd.f32 %v560, %v688
        %v690 = vpop.f32.mrb[0].mxu0
        %691 = vmatprep.mubr.f32.mxu0 0.0
        %692 = vmatmul.mubr.f32.gmra.mrb[0].mxu0 %v594
        %v693 = vpop.f32.mrb[0].mxu0
        %v694 = vadd.f32 %v565, %v693
        %v695 = vpop.f32.mrb[0].mxu0
        %696 = vmatprep.mubr.f32.mxu0 0.0
        %697 = vmatmul.mubr.f32.gmra.mrb[0].mxu0 %v597
        %v698 = vpop.f32.mrb[0].mxu0
        %v699 = vadd.f32 %v570, %v698
        %v700 = vpop.f32.mrb[0].mxu0
        %701 = vmatprep.mubr.f32.mxu0 0.0
        %702 = vmatmul.mubr.f32.gmra.mrb[0].mxu0 %v600
        %v703 = vpop.f32.mrb[0].mxu0
        %v704 = vadd.f32 %v575, %v703
        %v705 = vpop.f32.mrb[0].mxu0
        %706 = vdwg.mxu0
        %v707 = vmax.f32 %v669, 0.0
        %v708 = vmax.f32 %v674, 0.0
        %v709 = vmax.f32 %v679, 0.0
        %v710 = vmax.f32 %v684, 0.0
        %v711 = vmax.f32 %v689, 0.0
        %v712 = vmax.f32 %v694, 0.0
        %v713 = vmax.f32 %v699, 0.0
        %v714 = vmax.f32 %v704, 0.0
        %v715 = vld [vmem:[%s5] sm:$0xff]
        %v716 = vld [vmem:[%s5 + $0x8] sm:$0xff]
        %v717 = vld [vmem:[%s5 + $0x10] sm:$0xff]
        %v718 = vld [vmem:[%s5 + $0x18] sm:$0xff]
        %v719 = vld [vmem:[%s5 + $0x20] sm:$0xff]
        %v720 = vld [vmem:[%s5 + $0x28] sm:$0xff]
        %v721 = vld [vmem:[%s5 + $0x30] sm:$0xff]
        %v722 = vld [vmem:[%s5 + $0x38] sm:$0xff]
        %724 = vset.pattern.permute.xlu0 0
        %725 = vperm.xlu0 %724, %v715
        %v726 = vpop.permute.xlu0 %725
        %729 = vset.pattern.permute.xlu0 0
        %730 = vperm.xlu0 %729, %v716
        %v731 = vpop.permute.xlu0 %730
        %734 = vset.pattern.permute.xlu0 0
        %735 = vperm.xlu0 %734, %v717
        %v736 = vpop.permute.xlu0 %735
        %739 = vset.pattern.permute.xlu0 0
        %740 = vperm.xlu0 %739, %v718
        %v741 = vpop.permute.xlu0 %740
        %744 = vset.pattern.permute.xlu0 0
        %745 = vperm.xlu0 %744, %v719
        %v746 = vpop.permute.xlu0 %745
        %749 = vset.pattern.permute.xlu0 0
        %750 = vperm.xlu0 %749, %v720
        %v751 = vpop.permute.xlu0 %750
        %754 = vset.pattern.permute.xlu0 0
        %755 = vperm.xlu0 %754, %v721
        %v756 = vpop.permute.xlu0 %755
        %759 = vset.pattern.permute.xlu0 0
        %760 = vperm.xlu0 %759, %v722
        %v761 = vpop.permute.xlu0 %760
        %v763 = vmul.f32 %v707, %v726
        %v764 = vmul.f32 %v708, %v731
        %v765 = vmul.f32 %v709, %v736
        %v766 = vmul.f32 %v710, %v741
        %v767 = vmul.f32 %v711, %v746
        %v768 = vmul.f32 %v712, %v751
        %v769 = vmul.f32 %v713, %v756
        %v770 = vmul.f32 %v714, %v761
        %v771 = vadd.f32 %v763, %v764
        %v772 = vadd.f32 %v771, %v765
        %v773 = vadd.f32 %v772, %v766
        %v774 = vadd.f32 %v773, %v767
        %v775 = vadd.f32 %v774, %v768
        %v776 = vadd.f32 %v775, %v769
        %v777 = vadd.f32 %v776, %v770
        %v778 = vrot.slane %v777, 4
        %v779 = vadd.f32 %v777, %v778
        %v780 = vrot.slane %v779, 2
        %v781 = vadd.f32 %v779, %v780
        %v782 = vrot.slane %v781, 1
        %v783 = vadd.f32 %v781, %v782
        %s784 = sld [smem:[#allocation2]]
        %v785 = vstv %s784
        %v786 = vadd.f32 %v783, %v785
        %787 = vst [vmem:[%s322] sm:$0x1] %v786
        %s788 = sand.u32 %s182, 1
        %s789 = scalar_lea.sflag [#allocation5], %s788
        %s790 = sand.u32 %s182, 1
        %s791 = scalar_lea.vmem [#allocation4], %s790
        // Predicated region
        $region87: #{mlp_net.1} parent=81 // pred_check
          %p792 = pneg %p192
        $region88: #{mlp_net.1} parent=81 // pred_check_branch
          %794 = sbr.rel (%p792) target = $region90
        $region89: #{mlp_net.1} parent=81 // pred_region
          %s796 = ssub.s32 16, 16
          %797 = vsyncadd %s789, %s796
          %s798 = smul.addr %s22, 16
          %s799 = scalar_lea.hbm %s7, %s798
          %s801 = sshll.u32 %s791, 4
          %s802 = int_to_ptr.vmem [resolvable:$true] %s801
          %804 = dma.vmem_to_hbm [thread:$0]  %s802, 16, %s799, %s789
        $region90: #{mlp_net.1} parent=81 // pred_fallthru
          _
      $region82: #{mlp_net.1} parent=5 // pred_fallthru
        _
      %p805 = scmp.le.s32.totalorder 2, %s17
      // Predicated region
      $region91: #{mlp_net.1} parent=5 // pred_check
        %p806 = pneg %p805
      $region92: #{mlp_net.1} parent=5 // pred_check_branch
        %808 = sbr.rel (%p806) target = $region94
      $region93: #{mlp_net.1} parent=5 // pred_region
        %s809 = ssub.s32 %s17, 2
        // Predicated region
        $region95: #{mlp_net.1} parent=93 // pred_check
          %p810 = pneg %p198
        $region96: #{mlp_net.1} parent=93 // pred_check_branch
          %812 = sbr.rel (%p810) target = $region98
        $region97: #{mlp_net.1} parent=93 // pred_region
          %s813 = sand.u32 %s183, 1
          %s814 = scalar_lea.sflag [#allocation5], %s813
          %s815 = sand.u32 %s183, 1
          %s816 = scalar_lea.vmem [#allocation4], %s815
          %817 = dma.done %s814, 16
        $region98: #{mlp_net.1} parent=93 // pred_fallthru
          _
      $region94: #{mlp_net.1} parent=5 // pred_fallthru
        _
    $region6: #{mlp_net.1} parent=1 // loop_footer
      %s21 = sadd.s32 1, %s17
    $region7: #{mlp_net.1} parent=1 // loop_footer_branch
      %16 = sbr.rel target = $region3
    $region8: #{mlp_net.1} parent=1 // loop_exit
      _
    %818 = vsyncpa [#allocation5], 1
    %s819 = scalar_lea.sflag [#allocation5], 1
    %820 = vsyncpa %s819, 1

</llo_original>
